<compile_context>
chip_gen: v7x
topology: tpu7x:2x2x1
jax: 0.10.0
libtpu: 0.0.40
codegen_flags: <defaults>
</compile_context>

<pallas_src>
import functools

import jax
import jax.numpy as jnp
from jax.experimental import pallas as pl
from jax.experimental.pallas import tpu as pltpu

LANE = 128  # TPU vreg lane width; fc2 weights are padded up to this for the MXU.


def _mlp_sigmoid_kernel(x_ref, w1_ref, b1_ref, w2_ref, b2_ref, o_ref, *, out_dim):
    # fc1 + ReLU  (f32 accumulation on the MXU)
    h = jnp.dot(x_ref[...], w1_ref[...], preferred_element_type=jnp.float32)
    h = jnp.maximum(h + b1_ref[...], 0.0)                 # (TB, H) + (1, H)
    # fc2 + Sigmoid on the lane-padded weights, then slice to the true out_dim
    # before the store so only (TB, out_dim) ever goes back to HBM.
    z = jnp.dot(h, w2_ref[...], preferred_element_type=jnp.float32)
    y = jax.nn.sigmoid(z + b2_ref[...])                   # (TB, padded_out)
    o_ref[...] = y[:, :out_dim].astype(o_ref.dtype)       # masked vst, tiny cost


def prepare_params(w1, b1, w2, b2):
    """One-time parameter layout prep (NOT in the per-call hot path).

    Takes PyTorch nn.Linear layouts:
      w1: (hidden, input), b1: (hidden,), w2: (out, hidden), b2: (out,)
    Returns kernel-ready params:
      w1_t (input, hidden), b1 (1, hidden),
      w2_tp (hidden, padded_out) zero-padded to a 128-lane multiple,
      b2_p (1, padded_out) zero-padded, plus the true out_dim.
    """
    w1 = jnp.asarray(w1, jnp.float32)
    b1 = jnp.asarray(b1, jnp.float32)
    w2 = jnp.asarray(w2, jnp.float32)
    b2 = jnp.asarray(b2, jnp.float32)

    hidden = w1.shape[0]
    out_dim = w2.shape[0]
    padded_out = max(LANE, ((out_dim + LANE - 1) // LANE) * LANE)

    w1_t = w1.T                                            # (input, hidden)
    b1_2d = b1.reshape(1, hidden)                          # (1, hidden)
    w2_tp = jnp.zeros((hidden, padded_out), jnp.float32).at[:, :out_dim].set(w2.T)
    b2_p = jnp.zeros((1, padded_out), jnp.float32).at[:, :out_dim].set(b2)
    return (w1_t, b1_2d, w2_tp, b2_p), out_dim


def _round_up(n, m):
    return ((n + m - 1) // m) * m


def _choose_batch_tile(batch):
    """Batch tile: whole batch if small, else >=2 steps (v7x 2-TC sharding)."""
    if batch <= 1024:
        return batch                       # single step; overhead-bound anyway
    tb = _round_up(pl.cdiv(batch, 2), 8)   # at least 2 grid steps
    return min(tb, 8192)                   # ~2-3 MiB VMEM incl. double-buffering


@functools.partial(jax.jit, static_argnames=("out_dim", "min_pallas_batch"))
def mlp_with_sigmoid(x, params, *, out_dim, min_pallas_batch=0):
    """Forward pass: x (B, input_dim) f32 -> (B, out_dim) f32."""
    w1_t, b1_2d, w2_tp, b2_p = params
    B, input_dim = x.shape
    hidden = w1_t.shape[1]
    padded_out = w2_tp.shape[1]

    if B < min_pallas_batch:
        # Tiny-batch fast path: let XLA fuse the two small matmuls + sigmoid;
        # the cost at this scale is launch/DMA latency, not bandwidth/compute.
        h = jnp.maximum(x @ w1_t + b1_2d, 0.0)
        return jax.nn.sigmoid(h @ w2_tp[:, :out_dim] + b2_p[:, :out_dim])

    TB = _choose_batch_tile(B)
    grid = (pl.cdiv(B, TB),)
    kernel = functools.partial(_mlp_sigmoid_kernel, out_dim=out_dim)

    return pl.pallas_call(
        kernel,
        out_shape=jax.ShapeDtypeStruct((B, out_dim), jnp.float32),
        grid=grid,
        in_specs=[
            pl.BlockSpec((TB, input_dim), lambda i: (i, 0)),        # x: tiled over batch
            pl.BlockSpec((input_dim, hidden), lambda i: (0, 0)),    # w1: VMEM-resident
            pl.BlockSpec((1, hidden), lambda i: (0, 0)),            # b1: VMEM-resident
            pl.BlockSpec((hidden, padded_out), lambda i: (0, 0)),   # w2 (padded): resident
            pl.BlockSpec((1, padded_out), lambda i: (0, 0)),        # b2 (padded): resident
        ],
        # Last dim == full array dim (out_dim), so the (8,128) rule is satisfied.
        out_specs=pl.BlockSpec((TB, out_dim), lambda i: (i, 0)),
        compiler_params=pltpu.CompilerParams(
            dimension_semantics=("parallel",),
        ),
    )(x, w1_t, b1_2d, w2_tp, b2_p)


def _reference(x, w1, b1, w2, b2):
    """Pure-JAX reference with the PyTorch forward semantics."""
    return jax.nn.sigmoid(jnp.maximum(x @ w1.T + b1, 0.0) @ w2.T + b2)


if __name__ == "__main__":
    # Shapes implied by the module: x is (batch, input_dim); output_dim=3.
    batch, input_dim, hidden_dim, output_dim = 8, 32, 32, 3

    key = jax.random.PRNGKey(0)
    kx, kw1, kb1, kw2, kb2, kx_big = jax.random.split(key, 6)

    x = jax.random.normal(kx, (batch, input_dim), dtype=jnp.float32)
    # Deterministic synthetic parameters (PyTorch nn.Linear shapes).
    w1 = jax.random.normal(kw1, (hidden_dim, input_dim), dtype=jnp.float32) * 0.1
    b1 = jax.random.normal(kb1, (hidden_dim,), dtype=jnp.float32) * 0.1
    w2 = jax.random.normal(kw2, (output_dim, hidden_dim), dtype=jnp.float32) * 0.1
    b2 = jax.random.normal(kb2, (output_dim,), dtype=jnp.float32) * 0.1

    # One-time layout prep (outside the per-call hot path).
    params, out_dim = prepare_params(w1, b1, w2, b2)

    # Small-batch check (single grid step, exercises the Pallas path).
    out = mlp_with_sigmoid(x, params, out_dim=out_dim)
    out = jax.block_until_ready(out)
    ref = _reference(x, w1, b1, w2, b2)
    assert out.shape == (batch, output_dim)
    assert jnp.allclose(out, ref, atol=1e-5, rtol=1e-5)

    # Larger-batch check: multi-step grid with a partial tail block
    # (B=2056 -> TB=1032, 2 grid steps), exercising the v7x-friendly split.
    big_batch = 2056
    x_big = jax.random.normal(kx_big, (big_batch, input_dim), dtype=jnp.float32)
    out_big = mlp_with_sigmoid(x_big, params, out_dim=out_dim)
    out_big = jax.block_until_ready(out_big)
    ref_big = _reference(x_big, w1, b1, w2, b2)
    assert out_big.shape == (big_batch, output_dim)
    assert jnp.allclose(out_big, ref_big, atol=1e-5, rtol=1e-5)

    print("KERNEL_OK")
</pallas_src>

<mosaic_0001>
module attributes {stable_mosaic.version = 11 : i64} {
  func.func @_mlp_sigmoid_kernel(%arg0: i32, %arg1: memref<8x32xf32, #tpu.memory_space<vmem>>, %arg2: memref<32x32xf32, #tpu.memory_space<vmem>>, %arg3: memref<1x32xf32, #tpu.memory_space<vmem>>, %arg4: memref<32x128xf32, #tpu.memory_space<vmem>>, %arg5: memref<1x128xf32, #tpu.memory_space<vmem>>, %arg6: memref<8x3xf32, #tpu.memory_space<vmem>>) attributes {dimension_semantics = [#tpu.dimension_semantics<parallel>], iteration_bounds = array<i64: 1>, scalar_prefetch = 0 : i64, scratch_operands = 0 : i64, tpu.core_type = #tpu.core_type<tc>, window_params = [{transform_indices = @transform_0, window_bounds = array<i64: 8, 32>}, {pipeline_mode = #tpu.pipeline_mode<synchronous>, transform_indices = @transform_1, window_bounds = array<i64: 32, 32>}, {pipeline_mode = #tpu.pipeline_mode<synchronous>, transform_indices = @transform_2, window_bounds = array<i64: 1, 32>}, {pipeline_mode = #tpu.pipeline_mode<synchronous>, transform_indices = @transform_3, window_bounds = array<i64: 32, 128>}, {pipeline_mode = #tpu.pipeline_mode<synchronous>, transform_indices = @transform_4, window_bounds = array<i64: 1, 128>}, {transform_indices = @transform_5, window_bounds = array<i64: 8, 3>}]} {
    %c0 = arith.constant 0 : index
    %c0_0 = arith.constant 0 : index
    %0 = vector.load %arg1[%c0, %c0_0] : memref<8x32xf32, #tpu.memory_space<vmem>>, vector<8x32xf32>
    %c0_1 = arith.constant 0 : index
    %c0_2 = arith.constant 0 : index
    %1 = vector.load %arg2[%c0_1, %c0_2] : memref<32x32xf32, #tpu.memory_space<vmem>>, vector<32x32xf32>
    %cst = arith.constant dense<0.000000e+00> : vector<8x32xf32>
    %2 = tpu.matmul %0, %1, %cst {dimension_numbers = #tpu.dot_dimension_numbers<[1], [0], [0], [1], [0, 0, 1, 1], [], []>} : vector<8x32xf32>, vector<32x32xf32>, vector<8x32xf32> -> vector<8x32xf32>
    %c0_3 = arith.constant 0 : index
    %c0_4 = arith.constant 0 : index
    %3 = vector.load %arg3[%c0_3, %c0_4] : memref<1x32xf32, #tpu.memory_space<vmem>>, vector<1x32xf32>
    %4 = vector.broadcast %3 : vector<1x32xf32> to vector<8x32xf32>
    %5 = arith.addf %2, %4 : vector<8x32xf32>
    %cst_5 = arith.constant 0.000000e+00 : f32
    %6 = vector.broadcast %cst_5 : f32 to vector<8x32xf32>
    %7 = arith.maximumf %5, %6 : vector<8x32xf32>
    %c0_6 = arith.constant 0 : index
    %c0_7 = arith.constant 0 : index
    %8 = vector.load %arg4[%c0_6, %c0_7] : memref<32x128xf32, #tpu.memory_space<vmem>>, vector<32x128xf32>
    %cst_8 = arith.constant dense<0.000000e+00> : vector<8x128xf32>
    %9 = tpu.matmul %7, %8, %cst_8 {dimension_numbers = #tpu.dot_dimension_numbers<[1], [0], [0], [1], [0, 0, 1, 1], [], []>} : vector<8x32xf32>, vector<32x128xf32>, vector<8x128xf32> -> vector<8x128xf32>
    %c0_9 = arith.constant 0 : index
    %c0_10 = arith.constant 0 : index
    %10 = vector.load %arg5[%c0_9, %c0_10] : memref<1x128xf32, #tpu.memory_space<vmem>>, vector<1x128xf32>
    %11 = vector.broadcast %10 : vector<1x128xf32> to vector<8x128xf32>
    %12 = arith.addf %9, %11 : vector<8x128xf32>
    %13 = arith.negf %12 : vector<8x128xf32>
    %14 = math.exp %13 : vector<8x128xf32>
    %cst_11 = arith.constant 1.000000e+00 : f32
    %15 = vector.broadcast %cst_11 : f32 to vector<8x128xf32>
    %16 = arith.addf %15, %14 : vector<8x128xf32>
    %17 = arith.divf %15, %16 : vector<8x128xf32>
    %18 = vector.extract_strided_slice %17 {offsets = [0, 0], sizes = [8, 3], strides = [1, 1]} : vector<8x128xf32> to vector<8x3xf32>
    %c0_12 = arith.constant 0 : index
    %c0_13 = arith.constant 0 : index
    %19 = vector.load %arg6[%c0_12, %c0_13] : memref<8x3xf32, #tpu.memory_space<vmem>>, vector<8x3xf32>
    tpu.vector_store %arg6[%c0_12, %c0_13], %18 {strides = array<i32>} : memref<8x3xf32, #tpu.memory_space<vmem>>, vector<8x3xf32>,
    return
  }
  func.func @transform_0(%arg0: i32) -> (i32, i32) {
    %c0_i32 = arith.constant 0 : i32
    %c0_i32_0 = arith.constant 0 : i32
    return %arg0, %c0_i32 : i32, i32
  }
  func.func @transform_1(%arg0: i32) -> (i32, i32) {
    %c0_i32 = arith.constant 0 : i32
    %c0_i32_0 = arith.constant 0 : i32
    %c0_i32_1 = arith.constant 0 : i32
    return %c0_i32, %c0_i32_0 : i32, i32
  }
  func.func @transform_2(%arg0: i32) -> (i32, i32) {
    %c0_i32 = arith.constant 0 : i32
    %c0_i32_0 = arith.constant 0 : i32
    %c0_i32_1 = arith.constant 0 : i32
    return %c0_i32, %c0_i32_0 : i32, i32
  }
  func.func @transform_3(%arg0: i32) -> (i32, i32) {
    %c0_i32 = arith.constant 0 : i32
    %c0_i32_0 = arith.constant 0 : i32
    %c0_i32_1 = arith.constant 0 : i32
    return %c0_i32, %c0_i32_0 : i32, i32
  }
  func.func @transform_4(%arg0: i32) -> (i32, i32) {
    %c0_i32 = arith.constant 0 : i32
    %c0_i32_0 = arith.constant 0 : i32
    %c0_i32_1 = arith.constant 0 : i32
    return %c0_i32, %c0_i32_0 : i32, i32
  }
  func.func @transform_5(%arg0: i32) -> (i32, i32) {
    %c0_i32 = arith.constant 0 : i32
    %c0_i32_0 = arith.constant 0 : i32
    return %arg0, %c0_i32 : i32, i32
  }
}

</mosaic_0001>

<llo_original>
// kernel: mlp_with_sigmoid.1
$region0: #{mlp_with_sigmoid.1}
  #allocation0 [shape = 'u32[]', space=smem, size = 0x4, offset = 0x4, fixed_abs, tag = 'smem constant byte address 0x4 - core index']
  #allocation1 [shape = 'u32[144,128]{1,0:T(1,128)}', space=vmem, size = 0x12000, scoped, tag = 'internal scratch']
  %s0 = inlined_call_operand.hbm [shape: f32[8,32], index: 0, kind: input, shape index: {}]
  %s1 = inlined_call_operand.hbm [shape: f32[32,32], index: 1, kind: input, shape index: {}]
  %s2 = inlined_call_operand.vmem [shape: f32[1,32], index: 2, kind: input, shape index: {}]
  %s3 = inlined_call_operand.hbm [shape: f32[32,128], index: 3, kind: input, shape index: {}]
  %s4 = inlined_call_operand.vmem [shape: f32[1,128], index: 4, kind: input, shape index: {}]
  %s5 = inlined_call_operand.vmem [shape: f32[8,3], index: 5, kind: output, shape index: {}]
  %s6 = sld [smem:[#allocation0]]
  $region42: #{mlp_with_sigmoid.1} parent=0
    _
  %s8 = ssub.s32 1, %s6
  %s9 = scalar_select 0, %s8, %s6
  $region1: #{mlp_with_sigmoid.1} parent=0
    #allocation2 [shape = 'u8[4096]{0}', space=vmem, size = 0x1000, scoped, tag = 'input window, operand 0, single buffered']
    #allocation3 [shape = 's32[1]{0}', space=sflag, size = 0x4, scoped, tag = 'scoped memory for mlp_with_sigmoid.1']
    #allocation4 [shape = 'u8[16384]{0}', space=vmem, size = 0x4000, scoped, tag = 'input window, operand 1, single buffered']
    #allocation5 [shape = 's32[1]{0}', space=sflag, size = 0x4, scoped, tag = 'scoped memory for mlp_with_sigmoid.1']
    #allocation6 [shape = 'u8[16384]{0}', space=vmem, size = 0x4000, scoped, tag = 'input window, operand 3, single buffered']
    %10 = vsyncpa [#allocation3], 0
    %11 = vsyncpa [#allocation5], 0
    // Predicated region
    $region2: #{mlp_with_sigmoid.1} parent=1 // pred_check
      _
    $region3: #{mlp_with_sigmoid.1} parent=1 // pred_check_branch
      %13 = sbr.rel (0) target = $region5
    $region4: #{mlp_with_sigmoid.1} parent=1 // pred_region
      %s15 = ssub.s32 128, 128
      %16 = vsyncadd [#allocation3], %s15
      %s18 = sshll.u32 [#allocation2], 4
      %s19 = int_to_ptr.vmem [resolvable:$true] %s18
      %21 = dma.hbm_to_vmem [thread:$0]  %s0, 128, %s19, [#allocation3]
    $region5: #{mlp_with_sigmoid.1} parent=1 // pred_fallthru
      _
    // Predicated region
    $region6: #{mlp_with_sigmoid.1} parent=1 // pred_check
      _
    $region7: #{mlp_with_sigmoid.1} parent=1 // pred_check_branch
      %23 = sbr.rel (0) target = $region9
    $region8: #{mlp_with_sigmoid.1} parent=1 // pred_region
      %s25 = ssub.s32 512, 512
      %26 = vsyncadd [#allocation5], %s25
      %s27 = sshll.u32 [#allocation4], 4
      %s28 = int_to_ptr.vmem [resolvable:$true] %s27
      %33 = dma.hbm_to_vmem [thread:$0]  %s1, 512, %s28, [#allocation5], 128, 128, 8
    $region9: #{mlp_with_sigmoid.1} parent=1 // pred_fallthru
      _
    // Predicated region
    $region10: #{mlp_with_sigmoid.1} parent=1 // pred_check
      _
    $region11: #{mlp_with_sigmoid.1} parent=1 // pred_check_branch
      %35 = sbr.rel (0) target = $region13
    $region12: #{mlp_with_sigmoid.1} parent=1 // pred_region
      _
    $region13: #{mlp_with_sigmoid.1} parent=1 // pred_fallthru
      _
    // Predicated region
    $region14: #{mlp_with_sigmoid.1} parent=1 // pred_check
      _
    $region15: #{mlp_with_sigmoid.1} parent=1 // pred_check_branch
      %37 = sbr.rel (0) target = $region17
    $region16: #{mlp_with_sigmoid.1} parent=1 // pred_region
      %s39 = ssub.s32 512, 512
      %40 = vsyncadd [#allocation5], %s39
      %s41 = sshll.u32 [#allocation6], 4
      %s42 = int_to_ptr.vmem [resolvable:$true] %s41
      %47 = dma.hbm_to_vmem [thread:$0]  %s3, 512, %s42, [#allocation5], 128, 128, 8
    $region17: #{mlp_with_sigmoid.1} parent=1 // pred_fallthru
      _
    // Predicated region
    $region18: #{mlp_with_sigmoid.1} parent=1 // pred_check
      _
    $region19: #{mlp_with_sigmoid.1} parent=1 // pred_check_branch
      %49 = sbr.rel (0) target = $region21
    $region20: #{mlp_with_sigmoid.1} parent=1 // pred_region
      _
    $region21: #{mlp_with_sigmoid.1} parent=1 // pred_fallthru
      _
    // Predicated region
    $region22: #{mlp_with_sigmoid.1} parent=1 // pred_check
      _
    $region23: #{mlp_with_sigmoid.1} parent=1 // pred_check_branch
      %51 = sbr.rel (0) target = $region25
    $region24: #{mlp_with_sigmoid.1} parent=1 // pred_region
      %52 = dma.done [#allocation3], 128
    $region25: #{mlp_with_sigmoid.1} parent=1 // pred_fallthru
      _
    // Predicated region
    $region26: #{mlp_with_sigmoid.1} parent=1 // pred_check
      _
    $region27: #{mlp_with_sigmoid.1} parent=1 // pred_check_branch
      %54 = sbr.rel (0) target = $region29
    $region28: #{mlp_with_sigmoid.1} parent=1 // pred_region
      %55 = dma.done [#allocation5], 512
    $region29: #{mlp_with_sigmoid.1} parent=1 // pred_fallthru
      _
    // Predicated region
    $region30: #{mlp_with_sigmoid.1} parent=1 // pred_check
      _
    $region31: #{mlp_with_sigmoid.1} parent=1 // pred_check_branch
      %57 = sbr.rel (0) target = $region33
    $region32: #{mlp_with_sigmoid.1} parent=1 // pred_region
      %58 = dma.done [#allocation5], 512
    $region33: #{mlp_with_sigmoid.1} parent=1 // pred_fallthru
      _
    %v59 = vld [vmem:[#allocation2] sm:$0xff]
    %v60 = vld [vmem:[#allocation4] sm:$0xff]
    %v61 = vld [vmem:[#allocation4 + $0x8] sm:$0xff]
    %v62 = vld [vmem:[#allocation4 + $0x10] sm:$0xff]
    %v63 = vld [vmem:[#allocation4 + $0x18] sm:$0xff]
    %v64 = vld [vmem:[%s2] sm:$0x1]
    %v66 = vlaneseq
    %v67 = vshrl.u32 %v66, 7
    %v68 = vsub.s32 0, %v67
    %v69 = vrot.slane %v64, %v68
    %vm71 = vcmask 261120
    %v73 = vsel %vm71, %v59, 0
    %75 = vmatprep.subr.mxu0 0.0
    %76 = vmatpush1.msra.mxu0 %v60
    %77 = vmatprep.subr.mxu0 0.0
    %78 = vmatpush1.msra.mxu0 %v61
    %79 = vmatprep.subr.mxu0 0.0
    %80 = vmatpush1.msra.mxu0 %v62
    %81 = vmatprep.subr.mxu0 0.0
    %82 = vmatpush1.msra.mxu0 %v63
    %83 = vmatprep.subr.mxu0 0.0
    %84 = vmatpush1.msra.mxu0 0.0
    %85 = vmatprep.subr.mxu0 0.0
    %86 = vmatpush1.msra.mxu0 0.0
    %87 = vmatprep.subr.mxu0 0.0
    %88 = vmatpush1.msra.mxu0 0.0
    %89 = vmatprep.subr.mxu0 0.0
    %90 = vmatpush1.msra.mxu0 0.0
    %91 = vmatprep.subr.mxu0 0.0
    %92 = vmatpush1.msra.mxu0 0.0
    %93 = vmatprep.subr.mxu0 0.0
    %94 = vmatpush1.msra.mxu0 0.0
    %95 = vmatprep.subr.mxu0 0.0
    %96 = vmatpush1.msra.mxu0 0.0
    %97 = vmatprep.subr.mxu0 0.0
    %98 = vmatpush1.msra.mxu0 0.0
    %99 = vmatprep.subr.mxu0 0.0
    %100 = vmatpush1.msra.mxu0 0.0
    %101 = vmatprep.subr.mxu0 0.0
    %102 = vmatpush1.msra.mxu0 0.0
    %103 = vmatprep.subr.mxu0 0.0
    %104 = vmatpush1.msra.mxu0 0.0
    %105 = vmatprep.subr.mxu0 0.0
    %106 = vmatpush1.msra.mxu0 0.0
    %107 = vmatprep.subr.mxu0 0.0
    %108 = vmatpush1.msra.mxu0 0.0
    %109 = vmatprep.subr.mxu0 0.0
    %110 = vmatpush1.msra.mxu0 0.0
    %111 = vmatprep.subr.mxu0 0.0
    %112 = vmatpush1.msra.mxu0 0.0
    %113 = vmatprep.subr.mxu0 0.0
    %114 = vmatpush1.msra.mxu0 0.0
    %115 = vmatprep.subr.mxu0 0.0
    %116 = vmatpush1.msra.mxu0 0.0
    %117 = vmatprep.subr.mxu0 0.0
    %118 = vmatpush1.msra.mxu0 0.0
    %119 = vmatprep.subr.mxu0 0.0
    %120 = vmatpush1.msra.mxu0 0.0
    %121 = vmatprep.subr.mxu0 0.0
    %122 = vmatpush1.msra.mxu0 0.0
    %123 = vmatprep.subr.mxu0 0.0
    %124 = vmatpush1.msra.mxu0 0.0
    %125 = vmatprep.subr.mxu0 0.0
    %126 = vmatpush1.msra.mxu0 0.0
    %127 = vmatprep.subr.mxu0 0.0
    %128 = vmatpush1.msra.mxu0 0.0
    %129 = vmatprep.subr.mxu0 0.0
    %130 = vmatpush1.msra.mxu0 0.0
    %131 = vmatprep.subr.mxu0 0.0
    %132 = vmatpush1.msra.mxu0 0.0
    %133 = vmatprep.subr.mxu0 0.0
    %134 = vmatpush1.msra.mxu0 0.0
    %135 = vmatprep.subr.mxu0 0.0
    %136 = vmatpush1.msra.mxu0 0.0
    %137 = vmatprep.subr.mxu0 0.0
    %138 = vmatpush1.msra.mxu0 0.0
    %139 = vmatprep.mubr.f32.mxu0 0.0
    %140 = vmatmul.mubr.f32.gmra.mrb[0].mxu0 %v73
    %v141 = vpop.f32.mrb[0].mxu0
    %v142 = vadd.f32 %v69, %v141
    %v143 = vpop.f32.mrb[0].mxu0
    %144 = vdwg.mxu0
    %v145 = vmax.f32 %v142, 0.0
    %v146 = vld [vmem:[#allocation6] sm:$0xff]
    %v147 = vld [vmem:[#allocation6 + $0x8] sm:$0xff]
    %v148 = vld [vmem:[#allocation6 + $0x10] sm:$0xff]
    %v149 = vld [vmem:[#allocation6 + $0x18] sm:$0xff]
    %v150 = vld [vmem:[%s4] sm:$0x1]
    %v152 = vlaneseq
    %v153 = vshrl.u32 %v152, 7
    %v154 = vsub.s32 0, %v153
    %v155 = vrot.slane %v150, %v154
    %v158 = vsel %vm71, %v145, 0
    %160 = vmatprep.subr.mxu0 0.0
    %161 = vmatpush1.msra.mxu0 %v146
    %162 = vmatprep.subr.mxu0 0.0
    %163 = vmatpush1.msra.mxu0 %v147
    %164 = vmatprep.subr.mxu0 0.0
    %165 = vmatpush1.msra.mxu0 %v148
    %166 = vmatprep.subr.mxu0 0.0
    %167 = vmatpush1.msra.mxu0 %v149
    %168 = vmatprep.subr.mxu0 0.0
    %169 = vmatpush1.msra.mxu0 0.0
    %170 = vmatprep.subr.mxu0 0.0
    %171 = vmatpush1.msra.mxu0 0.0
    %172 = vmatprep.subr.mxu0 0.0
    %173 = vmatpush1.msra.mxu0 0.0
    %174 = vmatprep.subr.mxu0 0.0
    %175 = vmatpush1.msra.mxu0 0.0
    %176 = vmatprep.subr.mxu0 0.0
    %177 = vmatpush1.msra.mxu0 0.0
    %178 = vmatprep.subr.mxu0 0.0
    %179 = vmatpush1.msra.mxu0 0.0
    %180 = vmatprep.subr.mxu0 0.0
    %181 = vmatpush1.msra.mxu0 0.0
    %182 = vmatprep.subr.mxu0 0.0
    %183 = vmatpush1.msra.mxu0 0.0
    %184 = vmatprep.subr.mxu0 0.0
    %185 = vmatpush1.msra.mxu0 0.0
    %186 = vmatprep.subr.mxu0 0.0
    %187 = vmatpush1.msra.mxu0 0.0
    %188 = vmatprep.subr.mxu0 0.0
    %189 = vmatpush1.msra.mxu0 0.0
    %190 = vmatprep.subr.mxu0 0.0
    %191 = vmatpush1.msra.mxu0 0.0
    %192 = vmatprep.subr.mxu0 0.0
    %193 = vmatpush1.msra.mxu0 0.0
    %194 = vmatprep.subr.mxu0 0.0
    %195 = vmatpush1.msra.mxu0 0.0
    %196 = vmatprep.subr.mxu0 0.0
    %197 = vmatpush1.msra.mxu0 0.0
    %198 = vmatprep.subr.mxu0 0.0
    %199 = vmatpush1.msra.mxu0 0.0
    %200 = vmatprep.subr.mxu0 0.0
    %201 = vmatpush1.msra.mxu0 0.0
    %202 = vmatprep.subr.mxu0 0.0
    %203 = vmatpush1.msra.mxu0 0.0
    %204 = vmatprep.subr.mxu0 0.0
    %205 = vmatpush1.msra.mxu0 0.0
    %206 = vmatprep.subr.mxu0 0.0
    %207 = vmatpush1.msra.mxu0 0.0
    %208 = vmatprep.subr.mxu0 0.0
    %209 = vmatpush1.msra.mxu0 0.0
    %210 = vmatprep.subr.mxu0 0.0
    %211 = vmatpush1.msra.mxu0 0.0
    %212 = vmatprep.subr.mxu0 0.0
    %213 = vmatpush1.msra.mxu0 0.0
    %214 = vmatprep.subr.mxu0 0.0
    %215 = vmatpush1.msra.mxu0 0.0
    %216 = vmatprep.subr.mxu0 0.0
    %217 = vmatpush1.msra.mxu0 0.0
    %218 = vmatprep.subr.mxu0 0.0
    %219 = vmatpush1.msra.mxu0 0.0
    %220 = vmatprep.subr.mxu0 0.0
    %221 = vmatpush1.msra.mxu0 0.0
    %222 = vmatprep.subr.mxu0 0.0
    %223 = vmatpush1.msra.mxu0 0.0
    %224 = vmatprep.mubr.f32.mxu0 0.0
    %225 = vmatmul.mubr.f32.gmra.mrb[0].mxu0 %v158
    %v226 = vpop.f32.mrb[0].mxu0
    %v227 = vadd.f32 %v155, %v226
    %v228 = vpop.f32.mrb[0].mxu0
    %229 = vdwg.mxu0
    %v230 = vxor.u32 %v227, 2147483648
    %v231 = vmul.f32 %v230, 1.442695
    %v232 = vpow.pop %v231
    %v233 = vadd.f32 %v232, 1.0
    %v234 = vrcp.pop %v233
    %v235 = vmul.f32 1.0, %v234
    %vm236 = vcmask 23552
    %237 = vst.msk [vmem:[%s5] sm:$0xff] %vm236, %v235
    // Predicated region
    $region34: #{mlp_with_sigmoid.1} parent=1 // pred_check
      _
    $region35: #{mlp_with_sigmoid.1} parent=1 // pred_check_branch
      %239 = sbr.rel (0) target = $region37
    $region36: #{mlp_with_sigmoid.1} parent=1 // pred_region
      _
    $region37: #{mlp_with_sigmoid.1} parent=1 // pred_fallthru
      _
    // Predicated region
    $region38: #{mlp_with_sigmoid.1} parent=1 // pred_check
      _
    $region39: #{mlp_with_sigmoid.1} parent=1 // pred_check_branch
      %241 = sbr.rel (0) target = $region41
    $region40: #{mlp_with_sigmoid.1} parent=1 // pred_region
      _
    $region41: #{mlp_with_sigmoid.1} parent=1 // pred_fallthru
      _
    %242 = vsyncpa [#allocation3], 1
    %243 = vsyncpa [#allocation5], 1

</llo_original>
